<compile_context>
chip_gen: v7x
topology: tpu7x:2x2x1
jax: 0.10.0
libtpu: 0.0.40
codegen_flags: <defaults>
</compile_context>

<pallas_src>
import jax
import jax.numpy as jnp
from jax import lax
from jax.experimental import pallas as pl
from jax.experimental.pallas import tpu as pltpu


def _log_sigmoid(x):
    # numerically stable log(sigmoid(x)) = min(x, 0) - log1p(exp(-|x|))
    return jnp.minimum(x, 0.0) - jnp.log1p(jnp.exp(-jnp.abs(x)))


def _make_sgns_kernel(batch_tile, batch_size):
    def kernel(v_ref, u_ref, uhat_sum_ref, out_ref):
        v = v_ref[...].astype(jnp.float32)            # [Bt, D]
        u = u_ref[...].astype(jnp.float32)            # [Bt, D]
        us = uhat_sum_ref[...].astype(jnp.float32)    # [Bt, D] (sum over N done outside)

        # positive_val = log_sigmoid(sum(u * v, dim=1))
        pos = jnp.sum(u * v, axis=1, keepdims=True)   # [Bt, 1]
        # neg_val = log_sigmoid(-sum_n <u_hat[n], v>) = log_sigmoid(-<sum_n u_hat[n], v>)
        neg = jnp.sum(us * v, axis=1, keepdims=True)  # [Bt, 1]

        loss_b = _log_sigmoid(pos) + _log_sigmoid(-neg)  # [Bt, 1]

        # Mask padded batch rows so they do not contribute to the mean.
        row = (pl.program_id(0) * batch_tile
               + lax.broadcasted_iota(jnp.int32, (batch_tile, 1), 0))
        loss_b = jnp.where(row < batch_size, loss_b, 0.0)

        # Per-tile partial (negated) sum; final mean done in JAX.
        out_ref[0, 0] = -jnp.sum(loss_b)

    return kernel


def _round_up(x, m):
    return (x + m - 1) // m * m


def sgns_forward(target_weight, context_weight, target_idx, context_idx, neg_idx):
    """Exact semantics of SGNS.forward: returns scalar float32 loss."""
    B, N = neg_idx.shape
    D = target_weight.shape[1]

    # ---- glue (plain JAX): embedding gathers + pre-reduction over N -------
    # TODO(synk): the nn.Embedding gathers are data-dependent row gathers; they
    # stay in XLA (jnp.take) rather than in-kernel DMA gather.
    v = jnp.take(target_weight, target_idx, axis=0)                        # [B, D]
    u = jnp.take(context_weight, context_idx, axis=0)                      # [B, D]
    uhat = jnp.take(context_weight, neg_idx.reshape(-1), axis=0)           # [B*N, D]
    uhat_sum = uhat.reshape(B, N, D).sum(axis=1, dtype=jnp.float32)        # [B, D]

    # ---- batch tiling (Bt multiple of 8 sublanes, D = full lane extent) ----
    itemsize = 4
    vmem_budget = 24 * 1024 * 1024                 # double-buffered working-set cap
    max_bt = max(8, vmem_budget // (3 * 2 * D * itemsize))
    batch_tile = max(8, (min(512, max_bt) // 8) * 8)
    batch_tile = min(batch_tile, _round_up(B, 8))
    b_pad = _round_up(B, batch_tile)
    if b_pad != B:
        pad = b_pad - B
        v = jnp.pad(v, ((0, pad), (0, 0)))
        u = jnp.pad(u, ((0, pad), (0, 0)))
        uhat_sum = jnp.pad(uhat_sum, ((0, pad), (0, 0)))
    num_tiles = b_pad // batch_tile

    partials = pl.pallas_call(
        _make_sgns_kernel(batch_tile, B),
        out_shape=jax.ShapeDtypeStruct((num_tiles, 1), jnp.float32),
        grid=(num_tiles,),
        in_specs=[
            pl.BlockSpec((batch_tile, D), lambda i: (i, 0)),
            pl.BlockSpec((batch_tile, D), lambda i: (i, 0)),
            pl.BlockSpec((batch_tile, D), lambda i: (i, 0)),
        ],
        out_specs=pl.BlockSpec((1, 1), lambda i: (i, 0),
                               memory_space=pltpu.MemorySpace.SMEM),
        compiler_params=pltpu.CompilerParams(
            dimension_semantics=("parallel",),
            vmem_limit_bytes=32 * 1024 * 1024,
        ),
    )(v, u, uhat_sum)

    return jnp.sum(partials) / B


def _reference_loss(target_weight, context_weight, target_idx, context_idx, neg_idx):
    v = jnp.take(target_weight, target_idx, axis=0).astype(jnp.float32)
    u = jnp.take(context_weight, context_idx, axis=0).astype(jnp.float32)
    u_hat = jnp.take(context_weight, neg_idx.reshape(-1), axis=0).reshape(
        neg_idx.shape[0], neg_idx.shape[1], -1
    ).astype(jnp.float32)
    pos = jax.nn.log_sigmoid(jnp.sum(u * v, axis=1))
    neg_vals = jnp.einsum("bnd,bd->bn", u_hat, v)
    neg = jax.nn.log_sigmoid(-jnp.sum(neg_vals, axis=1))
    return -jnp.mean(pos + neg)


if __name__ == "__main__":
    vocab_size = 64
    emb_dim = 32
    batch = 10          # deliberately not a multiple of 8 to exercise masking
    neg_size = 5

    key = jax.random.PRNGKey(0)
    k_t, k_c, k_tgt, k_ctx, k_neg = jax.random.split(key, 5)

    # Deterministic parameter init matching SGNS.__init__:
    init_range = (2.0 / (vocab_size + emb_dim)) ** 0.5
    target_weight = jax.random.uniform(
        k_t, (vocab_size, emb_dim), minval=-init_range, maxval=init_range,
        dtype=jnp.float32)
    # context_emb.weight.data.uniform_(-0, 0) -> all zeros
    context_weight_init = jnp.zeros((vocab_size, emb_dim), dtype=jnp.float32)
    # Second (non-degenerate) context table to actually exercise the math.
    context_weight_rand = jax.random.uniform(
        k_c, (vocab_size, emb_dim), minval=-init_range, maxval=init_range,
        dtype=jnp.float32)

    target_idx = jax.random.randint(k_tgt, (batch,), 0, vocab_size, dtype=jnp.int32)
    context_idx = jax.random.randint(k_ctx, (batch,), 0, vocab_size, dtype=jnp.int32)
    neg_idx = jax.random.randint(k_neg, (batch, neg_size), 0, vocab_size,
                                 dtype=jnp.int32)

    fwd = jax.jit(sgns_forward)

    ok = True
    for ctx_w in (context_weight_init, context_weight_rand):
        loss = fwd(target_weight, ctx_w, target_idx, context_idx, neg_idx)
        jax.block_until_ready(loss)
        ref = _reference_loss(target_weight, ctx_w, target_idx, context_idx, neg_idx)
        ok = ok and bool(jnp.allclose(loss, ref, rtol=1e-5, atol=1e-5))
        assert ok, (loss, ref)

    print("KERNEL_OK")
</pallas_src>

<mosaic_0001>
module attributes {stable_mosaic.version = 11 : i64} {
  func.func @kernel(%arg0: i32, %arg1: memref<16x32xf32, #tpu.memory_space<vmem>>, %arg2: memref<16x32xf32, #tpu.memory_space<vmem>>, %arg3: memref<16x32xf32, #tpu.memory_space<vmem>>, %arg4: memref<1x1xf32, #tpu.memory_space<smem>>) attributes {dimension_semantics = [#tpu.dimension_semantics<parallel>], iteration_bounds = array<i64: 1>, scalar_prefetch = 0 : i64, scratch_operands = 0 : i64, tpu.core_type = #tpu.core_type<tc>, window_params = [{transform_indices = @transform_0, window_bounds = array<i64: 16, 32>}, {transform_indices = @transform_1, window_bounds = array<i64: 16, 32>}, {transform_indices = @transform_2, window_bounds = array<i64: 16, 32>}, {transform_indices = @transform_3, window_bounds = array<i64: 1, 1>}]} {
    %c0 = arith.constant 0 : index
    %c0_0 = arith.constant 0 : index
    %0 = vector.load %arg1[%c0, %c0_0] : memref<16x32xf32, #tpu.memory_space<vmem>>, vector<16x32xf32>
    %c0_1 = arith.constant 0 : index
    %c0_2 = arith.constant 0 : index
    %1 = vector.load %arg2[%c0_1, %c0_2] : memref<16x32xf32, #tpu.memory_space<vmem>>, vector<16x32xf32>
    %c0_3 = arith.constant 0 : index
    %c0_4 = arith.constant 0 : index
    %2 = vector.load %arg3[%c0_3, %c0_4] : memref<16x32xf32, #tpu.memory_space<vmem>>, vector<16x32xf32>
    %3 = arith.mulf %1, %0 : vector<16x32xf32>
    %cst = arith.constant dense<0.000000e+00> : vector<16xf32>
    %4 = vector.multi_reduction <add>, %3, %cst [1] : vector<16x32xf32> to vector<16xf32>
    %5 = vector.shape_cast %4 : vector<16xf32> to vector<16x1xf32>
    %6 = arith.mulf %2, %0 : vector<16x32xf32>
    %cst_5 = arith.constant dense<0.000000e+00> : vector<16xf32>
    %7 = vector.multi_reduction <add>, %6, %cst_5 [1] : vector<16x32xf32> to vector<16xf32>
    %8 = vector.shape_cast %7 : vector<16xf32> to vector<16x1xf32>
    %cst_6 = arith.constant 0.000000e+00 : f32
    %9 = vector.broadcast %cst_6 : f32 to vector<16x1xf32>
    %10 = arith.minimumf %5, %9 : vector<16x1xf32>
    %11 = math.absf %5 : vector<16x1xf32>
    %cst_7 = arith.constant 0.000000e+00 : f32
    %12 = vector.broadcast %cst_7 : f32 to vector<16x1xf32>
    %13 = arith.subf %12, %11 : vector<16x1xf32>
    %14 = math.exp %13 : vector<16x1xf32>
    %15 = math.log1p %14 : vector<16x1xf32>
    %16 = arith.subf %10, %15 : vector<16x1xf32>
    %cst_8 = arith.constant 0.000000e+00 : f32
    %17 = vector.broadcast %cst_8 : f32 to vector<16x1xf32>
    %18 = arith.subf %17, %8 : vector<16x1xf32>
    %cst_9 = arith.constant 0.000000e+00 : f32
    %19 = vector.broadcast %cst_9 : f32 to vector<16x1xf32>
    %20 = arith.minimumf %18, %19 : vector<16x1xf32>
    %21 = math.absf %18 : vector<16x1xf32>
    %cst_10 = arith.constant 0.000000e+00 : f32
    %22 = vector.broadcast %cst_10 : f32 to vector<16x1xf32>
    %23 = arith.subf %22, %21 : vector<16x1xf32>
    %24 = math.exp %23 : vector<16x1xf32>
    %25 = math.log1p %24 : vector<16x1xf32>
    %26 = arith.subf %20, %25 : vector<16x1xf32>
    %27 = arith.addf %16, %26 : vector<16x1xf32>
    %c16_i32 = arith.constant 16 : i32
    %28 = arith.muli %arg0, %c16_i32 : i32
    %29 = tpu.iota {dimensions = array<i32: 0>} : vector<16x1xi32>
    %30 = vector.broadcast %28 : i32 to vector<16x1xi32>
    %31 = arith.addi %30, %29 : vector<16x1xi32>
    %c10_i32 = arith.constant 10 : i32
    %32 = vector.broadcast %c10_i32 : i32 to vector<16x1xi32>
    %33 = arith.cmpi slt, %31, %32 : vector<16x1xi32>
    %cst_11 = arith.constant 0.000000e+00 : f32
    %34 = vector.broadcast %cst_11 : f32 to vector<16x1xf32>
    %35 = arith.select %33, %27, %34 : vector<16x1xi1>, vector<16x1xf32>
    %36 = vector.shape_cast %35 : vector<16x1xf32> to vector<1x16x1xf32>
    %cst_12 = arith.constant dense<0.000000e+00> : vector<1xf32>
    %37 = vector.multi_reduction <add>, %36, %cst_12 [1, 2] : vector<1x16x1xf32> to vector<1xf32>
    %38 = vector.shape_cast %37 : vector<1xf32> to vector<1x1x1xf32>
    %39 = vector.extract %38[0, 0, 0] : f32 from vector<1x1x1xf32>
    %cst_13 = arith.constant 0.000000e+00 : f32
    %40 = arith.subf %cst_13, %39 : f32
    %c0_14 = arith.constant 0 : index
    %c0_15 = arith.constant 0 : index
    %41 = memref.load %arg4[%c0_14, %c0_15] : memref<1x1xf32, #tpu.memory_space<smem>>
    memref.store %40, %arg4[%c0_14, %c0_15] : memref<1x1xf32, #tpu.memory_space<smem>>
    return
  }
  func.func @transform_0(%arg0: i32) -> (i32, i32) {
    %c0_i32 = arith.constant 0 : i32
    %c0_i32_0 = arith.constant 0 : i32
    return %arg0, %c0_i32 : i32, i32
  }
  func.func @transform_1(%arg0: i32) -> (i32, i32) {
    %c0_i32 = arith.constant 0 : i32
    %c0_i32_0 = arith.constant 0 : i32
    return %arg0, %c0_i32 : i32, i32
  }
  func.func @transform_2(%arg0: i32) -> (i32, i32) {
    %c0_i32 = arith.constant 0 : i32
    %c0_i32_0 = arith.constant 0 : i32
    return %arg0, %c0_i32 : i32, i32
  }
  func.func @transform_3(%arg0: i32) -> (i32, i32) {
    %c0_i32 = arith.constant 0 : i32
    %c0_i32_0 = arith.constant 0 : i32
    return %arg0, %c0_i32 : i32, i32
  }
}

</mosaic_0001>

<llo_original>
// kernel: sgns_forward.1
$region0: #{sgns_forward.1}
  #allocation0 [shape = 'u32[]', space=smem, size = 0x4, offset = 0x4, fixed_abs, tag = 'smem constant byte address 0x4 - core index']
  #allocation1 [shape = 'u32[144,128]{1,0:T(1,128)}', space=vmem, size = 0x12000, scoped, tag = 'internal scratch']
  %s0 = inlined_call_operand.vmem [shape: f32[16,32], index: 0, kind: input, shape index: {}]
  %s1 = inlined_call_operand.vmem [shape: f32[16,32], index: 1, kind: input, shape index: {}]
  %s2 = inlined_call_operand.vmem [shape: f32[16,32], index: 2, kind: input, shape index: {}]
  %s3 = inlined_call_operand.hbm [shape: f32[1,1], index: 3, kind: output, shape index: {}]
  %s4 = sld [smem:[#allocation0]]
  $region22: #{sgns_forward.1} parent=0
    _
  %s6 = ssub.s32 1, %s4
  %s7 = scalar_select 0, %s6, %s4
  $region1: #{sgns_forward.1} parent=0
    #allocation2 [shape = 'u8[512]{0}', space=smem, size = 0x200, scoped, tag = 'output window, operand 0, single buffered']
    #allocation3 [shape = 's32[1]{0}', space=sflag, size = 0x4, scoped, tag = 'scoped memory for sgns_forward.1']
    %8 = vsyncpa [#allocation3], 0
    // Predicated region
    $region2: #{sgns_forward.1} parent=1 // pred_check
      _
    $region3: #{sgns_forward.1} parent=1 // pred_check_branch
      %10 = sbr.rel (0) target = $region5
    $region4: #{sgns_forward.1} parent=1 // pred_region
      _
    $region5: #{sgns_forward.1} parent=1 // pred_fallthru
      _
    // Predicated region
    $region6: #{sgns_forward.1} parent=1 // pred_check
      _
    $region7: #{sgns_forward.1} parent=1 // pred_check_branch
      %12 = sbr.rel (0) target = $region9
    $region8: #{sgns_forward.1} parent=1 // pred_region
      _
    $region9: #{sgns_forward.1} parent=1 // pred_fallthru
      _
    // Predicated region
    $region10: #{sgns_forward.1} parent=1 // pred_check
      _
    $region11: #{sgns_forward.1} parent=1 // pred_check_branch
      %14 = sbr.rel (0) target = $region13
    $region12: #{sgns_forward.1} parent=1 // pred_region
      _
    $region13: #{sgns_forward.1} parent=1 // pred_fallthru
      _
    %v15 = vld [vmem:[%s0] sm:$0xff]
    %v16 = vld [vmem:[%s0 + $0x8] sm:$0xff]
    %v17 = vld [vmem:[%s1] sm:$0xff]
    %v18 = vld [vmem:[%s1 + $0x8] sm:$0xff]
    %v19 = vld [vmem:[%s2] sm:$0xff]
    %v20 = vld [vmem:[%s2 + $0x8] sm:$0xff]
    %v21 = vmul.f32 %v17, %v15
    %v22 = vmul.f32 %v18, %v16
    %vm23 = vcmask 261120
    %v24 = vsel %vm23, %v21, 0.0
    %25 = vadd.xlane.f32.xlu0 %v24
    %v26 = vpop.xlane.xlu0 %25
    %v27 = vsel %vm23, %v22, 0.0
    %28 = vadd.xlane.f32.xlu0 %v27
    %v29 = vpop.xlane.xlu0 %28
    %v30 = vmul.f32 %v19, %v15
    %v31 = vmul.f32 %v20, %v16
    %v32 = vsel %vm23, %v30, 0.0
    %33 = vadd.xlane.f32.xlu0 %v32
    %v34 = vpop.xlane.xlu0 %33
    %v35 = vsel %vm23, %v31, 0.0
    %36 = vadd.xlane.f32.xlu0 %v35
    %v37 = vpop.xlane.xlu0 %36
    %v38 = vmin.f32 %v26, 0.0
    %v39 = vmin.f32 %v29, 0.0
    %v40 = vand.u32 2147483647, %v26
    %v41 = vand.u32 2147483647, %v29
    %v42 = vsub.f32 0.0, %v40
    %v43 = vsub.f32 0.0, %v41
    %v44 = vmul.f32 %v42, 1.442695
    %v45 = vpow.pop %v44
    %v46 = vmul.f32 %v43, 1.442695
    %v47 = vpow.pop %v46
    %v48 = vadd.f32 %v45, 1.0
    %v49 = vlog2.pop %v48
    %v50 = vmul.f32 %v49, 0.6931472
    %v51 = vmul.f32 -0.5, %v45
    %v52 = vadd.f32 %v51, 1.0
    %v53 = vmul.f32 %v52, %v45
    %v54 = vand.u32 2147483647, %v45
    %vm55 = vcmp.lt.f32.partialorder %v54, 0.0004427343
    %v56 = vsel %vm55, %v53, %v50
    %v57 = vadd.f32 %v47, 1.0
    %v58 = vlog2.pop %v57
    %v59 = vmul.f32 %v58, 0.6931472
    %v60 = vmul.f32 -0.5, %v47
    %v61 = vadd.f32 %v60, 1.0
    %v62 = vmul.f32 %v61, %v47
    %v63 = vand.u32 2147483647, %v47
    %vm64 = vcmp.lt.f32.partialorder %v63, 0.0004427343
    %v65 = vsel %vm64, %v62, %v59
    %v66 = vsub.f32 %v38, %v56
    %v67 = vsub.f32 %v39, %v65
    %v68 = vsub.f32 0.0, %v34
    %v69 = vsub.f32 0.0, %v37
    %v70 = vmin.f32 %v68, 0.0
    %v71 = vmin.f32 %v69, 0.0
    %v72 = vand.u32 2147483647, %v68
    %v73 = vand.u32 2147483647, %v69
    %v74 = vsub.f32 0.0, %v72
    %v75 = vsub.f32 0.0, %v73
    %v76 = vmul.f32 %v74, 1.442695
    %v77 = vpow.pop %v76
    %v78 = vmul.f32 %v75, 1.442695
    %v79 = vpow.pop %v78
    %v80 = vadd.f32 %v77, 1.0
    %v81 = vlog2.pop %v80
    %v82 = vmul.f32 %v81, 0.6931472
    %v83 = vmul.f32 -0.5, %v77
    %v84 = vadd.f32 %v83, 1.0
    %v85 = vmul.f32 %v84, %v77
    %v86 = vand.u32 2147483647, %v77
    %vm87 = vcmp.lt.f32.partialorder %v86, 0.0004427343
    %v88 = vsel %vm87, %v85, %v82
    %v89 = vadd.f32 %v79, 1.0
    %v90 = vlog2.pop %v89
    %v91 = vmul.f32 %v90, 0.6931472
    %v92 = vmul.f32 -0.5, %v79
    %v93 = vadd.f32 %v92, 1.0
    %v94 = vmul.f32 %v93, %v79
    %v95 = vand.u32 2147483647, %v79
    %vm96 = vcmp.lt.f32.partialorder %v95, 0.0004427343
    %v97 = vsel %vm96, %v94, %v91
    %v98 = vsub.f32 %v70, %v88
    %v99 = vsub.f32 %v71, %v97
    %v100 = vadd.f32 %v66, %v98
    %v101 = vadd.f32 %v67, %v99
    %s102 = smul.u32 0, 16
    %v103 = vlaneseq
    %v104 = vshrl.u32 %v103, 7
    %v105 = vadd.s32 %v104, 8
    %v106 = vstv %s102
    %v107 = vadd.s32 %v106, %v104
    %v108 = vadd.s32 %v106, %v105
    %vm109 = vcmp.lt.s32.totalorder %v107, 10
    %vm110 = vcmp.lt.s32.totalorder %v108, 10
    %v111 = vsel %vm109, %v100, 0.0
    %v112 = vsel %vm110, %v101, 0.0
    %vm113 = vcmask 7168
    %v114 = vsel %vm113, %v111, 0.0
    %v115 = vsel %vm113, %v112, 0.0
    %v116 = vadd.f32 %v114, %v115
    %117 = vadd.xlane.f32.xlu0 %v116
    %v118 = vpop.xlane.xlu0 %117
    %v119 = vrot.slane %v118, 4
    %v120 = vadd.f32 %v118, %v119
    %v121 = vrot.slane %v120, 2
    %v122 = vadd.f32 %v120, %v121
    %v123 = vrot.slane %v122, 1
    %v124 = vadd.f32 %v122, %v123
    %s125 = vtos %v124
    %s126 = ssub.f32 0.0, %s125
    %s127 = scalar_lea.smem [#allocation2], 0
    %128 = sst [smem:[%s127]] %s126
    // Predicated region
    $region14: #{sgns_forward.1} parent=1 // pred_check
      _
    $region15: #{sgns_forward.1} parent=1 // pred_check_branch
      %130 = sbr.rel (0) target = $region17
    $region16: #{sgns_forward.1} parent=1 // pred_region
      %s132 = ssub.s32 16, 16
      %133 = vsyncadd [#allocation3], %s132
      %136 = dma.smem_to_hbm [#allocation2], 16, %s3, [#allocation3]
    $region17: #{sgns_forward.1} parent=1 // pred_fallthru
      _
    // Predicated region
    $region18: #{sgns_forward.1} parent=1 // pred_check
      _
    $region19: #{sgns_forward.1} parent=1 // pred_check_branch
      %138 = sbr.rel (0) target = $region21
    $region20: #{sgns_forward.1} parent=1 // pred_region
      %139 = dma.done [#allocation3], 16
    $region21: #{sgns_forward.1} parent=1 // pred_fallthru
      _
    %140 = sfence
    %141 = vsyncpa [#allocation3], 1

</llo_original>
